<compile_context>
chip_gen: v5e
topology: v5e:2x2
jax: 0.10.0
libtpu: 0.0.40
codegen_flags: <defaults>
</compile_context>

<pallas_src>
import functools

import jax
import jax.numpy as jnp
from jax.experimental import pallas as pl
from jax.experimental.pallas import tpu as pltpu


# ----------------------------------------------------------------------------
# Kernels
# ----------------------------------------------------------------------------

def _fused_group_norm_kernel(x_ref, gamma_ref, beta_ref, o_ref, *,
                             eps, inv_count, pad_count):
    # x_ref: (bn, G, Dn, L); gamma_ref/beta_ref: (1, G, Dn, 1).
    xf = x_ref[...].astype(jnp.float32)

    # mean (lanes first, then sublanes).
    s1 = jnp.sum(jnp.sum(xf, axis=3, keepdims=True), axis=2, keepdims=True)
    mean = s1 * inv_count                                   # (bn, G, 1, 1)

    # mean-shifted variance; subtract the exact contribution of zero padding
    # ((0 - mean)^2 per padded element), clamp for safety.
    centered = xf - mean
    css = jnp.sum(jnp.sum(centered * centered, axis=3, keepdims=True),
                  axis=2, keepdims=True)                    # (bn, G, 1, 1)
    var = (css - pad_count * (mean * mean)) * inv_count
    var = jnp.maximum(var, 0.0)
    inv_std = jax.lax.rsqrt(var + eps)                      # EUP slot

    a = gamma_ref[...].astype(jnp.float32) * inv_std        # (bn, G, Dn, 1)
    b = beta_ref[...].astype(jnp.float32)
    o_ref[...] = (centered * a + b).astype(o_ref.dtype)     # one FMA / element


def _stats_kernel(x_ref, s1_ref, s2_ref):
    # Grid: (batch, s_tiles) with the S axis "arbitrary"; s1/s2 are resident
    # accumulators (output block index constant along the S axis).
    @pl.when(pl.program_id(1) == 0)
    def _():
        s1_ref[...] = jnp.zeros_like(s1_ref)
        s2_ref[...] = jnp.zeros_like(s2_ref)

    xf = x_ref[...].astype(jnp.float32)
    s1_ref[...] += jnp.sum(jnp.sum(xf, axis=3, keepdims=True),
                           axis=2, keepdims=True)
    s2_ref[...] += jnp.sum(jnp.sum(xf * xf, axis=3, keepdims=True),
                           axis=2, keepdims=True)


def _apply_kernel(x_ref, a_ref, b_ref, o_ref):
    # out = x * a + b, with a/b at (1, G, Dn, 1) lane-broadcast over S.
    o_ref[...] = (x_ref[...].astype(jnp.float32) * a_ref[...]
                  + b_ref[...]).astype(o_ref.dtype)


# ----------------------------------------------------------------------------
# Planning helpers
# ----------------------------------------------------------------------------

def _vmem_plan():
    """(per-step VMEM budget, vmem_limit_bytes, target input-block bytes)."""
    cap = 64 << 20  # conservative default = v7x per-TC VMEM
    try:
        info = pltpu.get_tpu_info()
        cap = int(getattr(info, "vmem_capacity_bytes", cap))
    except Exception:
        pass
    cap = max(cap, 32 << 20)
    budget = min(40 << 20, int(cap * 0.45))
    vmem_limit = int(min(cap * 0.75, budget + (8 << 20)))
    target_bytes = 4 << 20      # ~4 MiB of input-dtype bytes per step
    return budget, vmem_limit, target_bytes


def _plan_layout(D, S, itemsize):
    """Lane padding + sublane folding plan. Returns (S_pad, fold, Dn, lane)."""
    S_pad = ((S + 127) // 128) * 128          # lane-dense stores
    m = S_pad // 128
    sub_target = 8 * max(1, 4 // itemsize)    # 8 (f32) / 16 (bf16) sublanes
    fold = 1
    if D < sub_target:
        k_max = max(1, sub_target // D)
        for k in range(min(k_max, m), 0, -1):
            if m % k == 0:
                fold = k
                break
    Dn = D * fold
    lane = S_pad // fold
    return S_pad, fold, Dn, lane


def _pick_batch_block(N, row_in_bytes, row_elems, budget, target_bytes):
    """Batch tile for the fused path: ~target_bytes of input per step, VMEM
    footprint (2x in + 2x out double buffers + ~3 f32 temps) within budget,
    and enough grid steps for pipelining / megacore sharding."""
    per_row = 4 * row_in_bytes + 3 * row_elems * 4
    bn = min(N, max(1, target_bytes // row_in_bytes), max(1, budget // per_row))
    if N >= 6:            # >=6 steps => >=3 per TC on v7x megacore
        bn = min(bn, max(1, N // 6))
    elif N >= 2:          # single-TC chips: >=2 steps for DMA overlap
        bn = min(bn, max(1, N // 2))
    return max(1, bn)


def _pick_s_block(lane, G, Dn, itemsize, budget, target_bytes):
    """S tile (multiple of 128 that divides `lane`) for the two-pass path."""
    m = lane // 128
    block_s = 128
    for d in range(m, 0, -1):
        if m % d:
            continue
        bs = d * 128
        elems = G * Dn * bs
        in_bytes = elems * itemsize
        foot = 4 * in_bytes + 3 * elems * 4
        if in_bytes <= target_bytes and foot <= budget:
            block_s = bs
            break
    return block_s


# ----------------------------------------------------------------------------
# Wrapper
# ----------------------------------------------------------------------------

def group_norm_2d(x, gamma, beta, num_groups, eps=1e-5, block_n=None,
                  force_two_pass=False):
    """x: (N, C, H, W); gamma, beta: (1, C, 1, 1). Returns (N, C, H, W)."""
    N, C, H, W = x.shape
    G = num_groups
    assert C % G == 0, "channels must be divisible by groups"
    D = C // G
    S = H * W
    itemsize = x.dtype.itemsize

    S_pad, fold, Dn, lane = _plan_layout(D, S, itemsize)

    # Layout glue: group split out, spatial (zero-padded) on the lane axis,
    # small-D folded onto sublanes, gamma/beta repeated to match.
    x4 = x.reshape(N, G, D, S)
    if S_pad != S:
        x4 = jnp.pad(x4, ((0, 0), (0, 0), (0, 0), (0, S_pad - S)))
    xg = x4.reshape(N, G, Dn, lane)
    gg = gamma.reshape(1, G, D, 1).astype(jnp.float32)
    bg = beta.reshape(1, G, D, 1).astype(jnp.float32)
    if fold > 1:
        gg = jnp.repeat(gg, fold, axis=2)
        bg = jnp.repeat(bg, fold, axis=2)

    budget, vmem_limit, target_bytes = _vmem_plan()

    inv_count = 1.0 / float(D * S)            # true element count (no padding)
    pad_count = float(D * (S_pad - S))        # zero-padded elements per group

    row_elems = G * Dn * lane
    row_in = row_elems * itemsize
    per_row = 4 * row_in + 3 * row_elems * 4
    use_fused = (not force_two_pass) and per_row <= budget

    if use_fused:
        bn = block_n if block_n is not None else _pick_batch_block(
            N, row_in, row_elems, budget, target_bytes)
        grid = (pl.cdiv(N, bn),)              # ragged last block: writes masked
        out = pl.pallas_call(
            functools.partial(_fused_group_norm_kernel, eps=eps,
                              inv_count=inv_count, pad_count=pad_count),
            out_shape=jax.ShapeDtypeStruct((N, G, Dn, lane), x.dtype),
            grid_spec=pltpu.PrefetchScalarGridSpec(
                num_scalar_prefetch=0,
                grid=grid,
                in_specs=[
                    pl.BlockSpec((bn, G, Dn, lane), lambda i: (i, 0, 0, 0)),
                    pl.BlockSpec((1, G, Dn, 1), lambda i: (0, 0, 0, 0)),
                    pl.BlockSpec((1, G, Dn, 1), lambda i: (0, 0, 0, 0)),
                ],
                out_specs=pl.BlockSpec((bn, G, Dn, lane), lambda i: (i, 0, 0, 0)),
            ),
            compiler_params=pltpu.CompilerParams(
                dimension_semantics=("parallel",),
                vmem_limit_bytes=vmem_limit,
            ),
        )(xg, gg, bg)
    else:
        # Two-pass path for feature maps too large for a single-sample block.
        block_s = _pick_s_block(lane, G, Dn, itemsize, budget, target_bytes)
        n_s = lane // block_s

        s1, s2 = pl.pallas_call(
            _stats_kernel,
            out_shape=(jax.ShapeDtypeStruct((N, G, 1, 1), jnp.float32),
                       jax.ShapeDtypeStruct((N, G, 1, 1), jnp.float32)),
            grid_spec=pltpu.PrefetchScalarGridSpec(
                num_scalar_prefetch=0,
                grid=(N, n_s),
                in_specs=[pl.BlockSpec((1, G, Dn, block_s),
                                       lambda i, j: (i, 0, 0, j))],
                out_specs=[pl.BlockSpec((1, G, 1, 1), lambda i, j: (i, 0, 0, 0)),
                           pl.BlockSpec((1, G, 1, 1), lambda i, j: (i, 0, 0, 0))],
            ),
            compiler_params=pltpu.CompilerParams(
                dimension_semantics=("parallel", "arbitrary"),
                vmem_limit_bytes=vmem_limit,
            ),
        )(xg)

        # Tiny per-(sample, group) math in plain JAX; fold affine into a/b.
        mean = s1 * inv_count
        var = jnp.maximum(s2 * inv_count - mean * mean, 0.0)
        # TODO(synk): E[x^2]-mean^2 can lose accuracy when |mean| >> std; a
        # mean-shifted second stats pass would fix it at the cost of one extra
        # HBM read of x.
        inv_std = jax.lax.rsqrt(var + eps)
        a = gg * inv_std                       # (N, G, Dn, 1)
        b = bg - mean * a                      # (N, G, Dn, 1)

        out = pl.pallas_call(
            _apply_kernel,
            out_shape=jax.ShapeDtypeStruct((N, G, Dn, lane), x.dtype),
            grid_spec=pltpu.PrefetchScalarGridSpec(
                num_scalar_prefetch=0,
                grid=(N, n_s),
                in_specs=[
                    pl.BlockSpec((1, G, Dn, block_s), lambda i, j: (i, 0, 0, j)),
                    pl.BlockSpec((1, G, Dn, 1), lambda i, j: (i, 0, 0, 0)),
                    pl.BlockSpec((1, G, Dn, 1), lambda i, j: (i, 0, 0, 0)),
                ],
                out_specs=pl.BlockSpec((1, G, Dn, block_s),
                                       lambda i, j: (i, 0, 0, j)),
            ),
            compiler_params=pltpu.CompilerParams(
                dimension_semantics=("parallel", "parallel"),
                vmem_limit_bytes=vmem_limit,
            ),
        )(xg, a, b)

    out = out.reshape(N, G, D, S_pad)
    if S_pad != S:
        out = out[..., :S]
    return out.reshape(N, C, H, W)


# ----------------------------------------------------------------------------
# Reference + tests
# ----------------------------------------------------------------------------

def group_norm_2d_ref(x, gamma, beta, num_groups, eps=1e-5):
    """Pure-JAX reference mirroring the PyTorch module (f32 compute)."""
    N, C, H, W = x.shape
    G = num_groups
    xg = x.reshape(N, G, -1).astype(jnp.float32)
    mean = jnp.mean(xg, axis=2, keepdims=True)
    var = jnp.sum((xg - mean) ** 2, axis=2, keepdims=True) / xg.shape[2]
    xhat = (xg - mean) / jnp.sqrt(var + eps)
    return (xhat.reshape(N, C, H, W) * gamma.astype(jnp.float32)
            + beta.astype(jnp.float32))


if __name__ == "__main__":
    key = jax.random.PRNGKey(0)
    kx, kg, kb = jax.random.split(key, 3)

    def check(x, gamma, beta, G, eps=1e-5, tol=1e-4, **kw):
        out = jax.block_until_ready(
            group_norm_2d(x, gamma, beta, num_groups=G, eps=eps, **kw))
        ref = group_norm_2d_ref(x, gamma, beta, num_groups=G, eps=eps)
        assert out.shape == x.shape
        assert jnp.allclose(out.astype(jnp.float32), ref, atol=tol, rtol=tol), \
            "mismatch vs reference"

    # Module config: channels=C, groups=G; input (N, C, H, W).
    N, C, G, H, W = 2, 4, 2, 16, 16
    # Nonzero mean exercises the mean-shifted variance path.
    x = jax.random.normal(kx, (N, C, H, W), dtype=jnp.float32) + 3.0
    gamma = 1.0 + 0.1 * jax.random.normal(kg, (1, C, 1, 1), dtype=jnp.float32)
    beta = 0.1 * jax.random.normal(kb, (1, C, 1, 1), dtype=jnp.float32)

    # 1) Primary config: fused single-kernel path (lane-dense, sublane fold).
    check(x, gamma, beta, G)

    # 2) Ragged batch blocks (N=3, block_n=2) + lane padding (S=63 -> 128).
    x2 = jax.random.normal(kx, (3, 4, 7, 9), dtype=jnp.float32) + 1.5
    check(x2, gamma, beta, 2, block_n=2)

    # 3) Two-pass path (stats kernel + apply kernel), forced at small shapes.
    check(x, gamma, beta, G, force_two_pass=True)

    # 4) bf16 input (output quantized to bf16 -> looser tolerance).
    check(x.astype(jnp.bfloat16), gamma, beta, G, tol=3e-2)

    print("KERNEL_OK")
</pallas_src>

<mosaic_0001>
module attributes {stable_mosaic.version = 11 : i64} {
  func.func @_fused_group_norm_kernel(%arg0: i32, %arg1: memref<1x2x4x128xf32, #tpu.memory_space<vmem>>, %arg2: memref<1x2x4x1xf32, #tpu.memory_space<vmem>>, %arg3: memref<1x2x4x1xf32, #tpu.memory_space<vmem>>, %arg4: memref<1x2x4x128xf32, #tpu.memory_space<vmem>>) attributes {dimension_semantics = [#tpu.dimension_semantics<parallel>], iteration_bounds = array<i64: 2>, scalar_prefetch = 0 : i64, scratch_operands = 0 : i64, tpu.core_type = #tpu.core_type<tc>, window_params = [{transform_indices = @transform_0, window_bounds = array<i64: 1, 2, 4, 128>}, {pipeline_mode = #tpu.pipeline_mode<synchronous>, transform_indices = @transform_1, window_bounds = array<i64: 1, 2, 4, 1>}, {pipeline_mode = #tpu.pipeline_mode<synchronous>, transform_indices = @transform_2, window_bounds = array<i64: 1, 2, 4, 1>}, {transform_indices = @transform_3, window_bounds = array<i64: 1, 2, 4, 128>}]} {
    %c0 = arith.constant 0 : index
    %c0_0 = arith.constant 0 : index
    %c0_1 = arith.constant 0 : index
    %c0_2 = arith.constant 0 : index
    %0 = vector.load %arg1[%c0, %c0_0, %c0_1, %c0_2] : memref<1x2x4x128xf32, #tpu.memory_space<vmem>>, vector<1x2x4x128xf32>
    %cst = arith.constant dense<0.000000e+00> : vector<1x2x4xf32>
    %1 = vector.multi_reduction <add>, %0, %cst [3] : vector<1x2x4x128xf32> to vector<1x2x4xf32>
    %2 = vector.shape_cast %1 : vector<1x2x4xf32> to vector<1x2x4x1xf32>
    %cst_3 = arith.constant dense<0.000000e+00> : vector<1x2x1xf32>
    %3 = vector.multi_reduction <add>, %2, %cst_3 [2] : vector<1x2x4x1xf32> to vector<1x2x1xf32>
    %4 = vector.shape_cast %3 : vector<1x2x1xf32> to vector<1x2x1x1xf32>
    %cst_4 = arith.constant 0.001953125 : f32
    %5 = vector.broadcast %cst_4 : f32 to vector<1x2x1x1xf32>
    %6 = arith.mulf %4, %5 : vector<1x2x1x1xf32>
    %7 = vector.broadcast %6 : vector<1x2x1x1xf32> to vector<1x2x4x128xf32>
    %8 = arith.subf %0, %7 : vector<1x2x4x128xf32>
    %9 = arith.mulf %8, %8 : vector<1x2x4x128xf32>
    %cst_5 = arith.constant dense<0.000000e+00> : vector<1x2x4xf32>
    %10 = vector.multi_reduction <add>, %9, %cst_5 [3] : vector<1x2x4x128xf32> to vector<1x2x4xf32>
    %11 = vector.shape_cast %10 : vector<1x2x4xf32> to vector<1x2x4x1xf32>
    %cst_6 = arith.constant dense<0.000000e+00> : vector<1x2x1xf32>
    %12 = vector.multi_reduction <add>, %11, %cst_6 [2] : vector<1x2x4x1xf32> to vector<1x2x1xf32>
    %13 = vector.shape_cast %12 : vector<1x2x1xf32> to vector<1x2x1x1xf32>
    %14 = arith.mulf %6, %6 : vector<1x2x1x1xf32>
    %cst_7 = arith.constant 0.000000e+00 : f32
    %15 = vector.broadcast %cst_7 : f32 to vector<1x2x1x1xf32>
    %16 = arith.mulf %15, %14 : vector<1x2x1x1xf32>
    %17 = arith.subf %13, %16 : vector<1x2x1x1xf32>
    %cst_8 = arith.constant 0.001953125 : f32
    %18 = vector.broadcast %cst_8 : f32 to vector<1x2x1x1xf32>
    %19 = arith.mulf %17, %18 : vector<1x2x1x1xf32>
    %cst_9 = arith.constant 0.000000e+00 : f32
    %20 = vector.broadcast %cst_9 : f32 to vector<1x2x1x1xf32>
    %21 = arith.maximumf %19, %20 : vector<1x2x1x1xf32>
    %cst_10 = arith.constant 9.99999974E-6 : f32
    %22 = vector.broadcast %cst_10 : f32 to vector<1x2x1x1xf32>
    %23 = arith.addf %21, %22 : vector<1x2x1x1xf32>
    %24 = math.rsqrt %23 : vector<1x2x1x1xf32>
    %c0_11 = arith.constant 0 : index
    %c0_12 = arith.constant 0 : index
    %c0_13 = arith.constant 0 : index
    %c0_14 = arith.constant 0 : index
    %25 = vector.load %arg2[%c0_11, %c0_12, %c0_13, %c0_14] : memref<1x2x4x1xf32, #tpu.memory_space<vmem>>, vector<1x2x4x1xf32>
    %26 = vector.broadcast %24 : vector<1x2x1x1xf32> to vector<1x2x4x1xf32>
    %27 = arith.mulf %25, %26 : vector<1x2x4x1xf32>
    %c0_15 = arith.constant 0 : index
    %c0_16 = arith.constant 0 : index
    %c0_17 = arith.constant 0 : index
    %c0_18 = arith.constant 0 : index
    %28 = vector.load %arg3[%c0_15, %c0_16, %c0_17, %c0_18] : memref<1x2x4x1xf32, #tpu.memory_space<vmem>>, vector<1x2x4x1xf32>
    %29 = vector.broadcast %27 : vector<1x2x4x1xf32> to vector<1x2x4x128xf32>
    %30 = arith.mulf %8, %29 : vector<1x2x4x128xf32>
    %31 = vector.broadcast %28 : vector<1x2x4x1xf32> to vector<1x2x4x128xf32>
    %32 = arith.addf %30, %31 : vector<1x2x4x128xf32>
    %c0_19 = arith.constant 0 : index
    %c0_20 = arith.constant 0 : index
    %c0_21 = arith.constant 0 : index
    %c0_22 = arith.constant 0 : index
    %33 = vector.load %arg4[%c0_19, %c0_20, %c0_21, %c0_22] : memref<1x2x4x128xf32, #tpu.memory_space<vmem>>, vector<1x2x4x128xf32>
    tpu.vector_store %arg4[%c0_19, %c0_20, %c0_21, %c0_22], %32 {strides = array<i32>} : memref<1x2x4x128xf32, #tpu.memory_space<vmem>>, vector<1x2x4x128xf32>,
    return
  }
  func.func @transform_0(%arg0: i32) -> (i32, i32, i32, i32) {
    %c0_i32 = arith.constant 0 : i32
    %c0_i32_0 = arith.constant 0 : i32
    %c0_i32_1 = arith.constant 0 : i32
    %c0_i32_2 = arith.constant 0 : i32
    return %arg0, %c0_i32, %c0_i32_0, %c0_i32_1 : i32, i32, i32, i32
  }
  func.func @transform_1(%arg0: i32) -> (i32, i32, i32, i32) {
    %c0_i32 = arith.constant 0 : i32
    %c0_i32_0 = arith.constant 0 : i32
    %c0_i32_1 = arith.constant 0 : i32
    %c0_i32_2 = arith.constant 0 : i32
    %c0_i32_3 = arith.constant 0 : i32
    return %c0_i32, %c0_i32_0, %c0_i32_1, %c0_i32_2 : i32, i32, i32, i32
  }
  func.func @transform_2(%arg0: i32) -> (i32, i32, i32, i32) {
    %c0_i32 = arith.constant 0 : i32
    %c0_i32_0 = arith.constant 0 : i32
    %c0_i32_1 = arith.constant 0 : i32
    %c0_i32_2 = arith.constant 0 : i32
    %c0_i32_3 = arith.constant 0 : i32
    return %c0_i32, %c0_i32_0, %c0_i32_1, %c0_i32_2 : i32, i32, i32, i32
  }
  func.func @transform_3(%arg0: i32) -> (i32, i32, i32, i32) {
    %c0_i32 = arith.constant 0 : i32
    %c0_i32_0 = arith.constant 0 : i32
    %c0_i32_1 = arith.constant 0 : i32
    %c0_i32_2 = arith.constant 0 : i32
    return %arg0, %c0_i32, %c0_i32_0, %c0_i32_1 : i32, i32, i32, i32
  }
}

</mosaic_0001>

<llo_original>
// kernel: tpu_custom_call.1
$region0: #{tpu_custom_call.1}
  #allocation0 [shape = 'u32[]', space=smem, size = 0x4, offset = 0x4, fixed_abs, tag = 'smem constant byte address 0x4 - core index']
  #allocation1 [shape = 'u32[72,128]{1,0:T(1,128)}', space=vmem, size = 0x9000, scoped, tag = 'internal scratch']
  %s0 = inlined_call_operand.vmem [shape: f32[2,2,4,128], index: 0, kind: input, shape index: {}]
  %s1 = inlined_call_operand.vmem [shape: f32[1,2,4,1], index: 1, kind: input, shape index: {}]
  %s2 = inlined_call_operand.vmem [shape: f32[1,2,4,1], index: 2, kind: input, shape index: {}]
  %s3 = inlined_call_operand.hbm [shape: f32[2,2,4,128], index: 3, kind: output, shape index: {}]
  %s4 = sld [smem:[#allocation0]]
  $region45: #{tpu_custom_call.1} parent=0
    _
  %s6 = ssub.s32 1, %s4
  %s7 = scalar_select 0, %s6, %s4
  $region1: #{tpu_custom_call.1} parent=0
    #allocation2 [shape = 'u8[8192]{0}', space=vmem, size = 0x2000, scoped, tag = 'output window, operand 0']
    #allocation3 [shape = 's32[2]{0}', space=sflag, size = 0x8, scoped, tag = 'scoped memory for tpu_custom_call.1']
    %8 = vsyncpa [#allocation3], 0
    %s9 = scalar_lea.sflag [#allocation3], 1
    %10 = vsyncpa %s9, 0
    loop: start=0, step=1, limit=4
    $region2: #{tpu_custom_call.1} parent=1 // loop_pre_header
      _
    $region3: #{tpu_custom_call.1} parent=1 // loop_header
      %s12 = sphi 0, %s16
      %p13 = scmp.ge.s32.totalorder %s12, 4
      %s22 = sphi 0, %s24
      %s25 = sphi 0, %s22
      %s26 = sphi 0, %s25
      %s42 = sphi 0, %s26
      %s46 = sphi 0, %s46
      %s48 = sphi 0, %s46
      %s49 = sphi 0, %s48
      %s63 = sphi 0, %s49
      %s67 = sphi 0, %s67
      %s69 = sphi 0, %s67
      %s70 = sphi 0, %s69
      %s84 = sphi 0, %s70
      %s90 = sphi 0, %s92
      %s93 = sphi 0, %s90
      %s94 = sphi 0, %s93
      %s110 = sphi 0, %s94
    $region4: #{tpu_custom_call.1} parent=1 // loop_header_branch
      %15 = sbr.rel (%p13) target = $region8
    $region5: #{tpu_custom_call.1} parent=1 // loop_body
      %s17 = ssub.s32 %s12, 1
      %s18 = ssub.s32 %s12, 2
      %s19 = sadd.s32 %s12, 1
      %s20 = ssub.s32 %s12, %s19
      %p21 = scmp.eq.s32.totalorder %s20, 0
      %s23 = sadd.s32 %s22, 1
      %s24 = scalar_select %p21, %s22, %s23
      %p27 = pneg %p21
      %p28 = scmp.eq.s32.totalorder %s12, 1
      %p29 = por %p27, %p28
      %p30 = scmp.ne.s32.totalorder %s22, %s25
      %p31 = scmp.eq.s32.totalorder %s12, 0
      %p32 = por %p30, %p31
      %p33 = scmp.ne.s32.totalorder %s22, %s25
      %p34 = scmp.eq.s32.totalorder %s17, 1
      %p35 = por %p33, %p34
      %p36 = scmp.ne.s32.totalorder %s25, %s26
      %p37 = scmp.eq.s32.totalorder %s17, 0
      %p38 = por %p36, %p37
      %p39 = scmp.ne.s32.totalorder %s25, %s26
      %p40 = scmp.eq.s32.totalorder %s18, 1
      %p41 = por %p39, %p40
      %p43 = scmp.ne.s32.totalorder %s26, %s42
      %p44 = scmp.eq.s32.totalorder %s18, 0
      %p45 = por %p43, %p44
      %s47 = sadd.s32 %s46, 1
      %p50 = scmp.eq.s32.totalorder %s12, 1
      %p51 = scmp.ne.s32.totalorder %s46, %s48
      %p52 = scmp.eq.s32.totalorder %s12, 0
      %p53 = por %p51, %p52
      %p54 = scmp.ne.s32.totalorder %s46, %s48
      %p55 = scmp.eq.s32.totalorder %s17, 1
      %p56 = por %p54, %p55
      %p57 = scmp.ne.s32.totalorder %s48, %s49
      %p58 = scmp.eq.s32.totalorder %s17, 0
      %p59 = por %p57, %p58
      %p60 = scmp.ne.s32.totalorder %s48, %s49
      %p61 = scmp.eq.s32.totalorder %s18, 1
      %p62 = por %p60, %p61
      %p64 = scmp.ne.s32.totalorder %s49, %s63
      %p65 = scmp.eq.s32.totalorder %s18, 0
      %p66 = por %p64, %p65
      %s68 = sadd.s32 %s67, 1
      %p71 = scmp.eq.s32.totalorder %s12, 1
      %p72 = scmp.ne.s32.totalorder %s67, %s69
      %p73 = scmp.eq.s32.totalorder %s12, 0
      %p74 = por %p72, %p73
      %p75 = scmp.ne.s32.totalorder %s67, %s69
      %p76 = scmp.eq.s32.totalorder %s17, 1
      %p77 = por %p75, %p76
      %p78 = scmp.ne.s32.totalorder %s69, %s70
      %p79 = scmp.eq.s32.totalorder %s17, 0
      %p80 = por %p78, %p79
      %p81 = scmp.ne.s32.totalorder %s69, %s70
      %p82 = scmp.eq.s32.totalorder %s18, 1
      %p83 = por %p81, %p82
      %p85 = scmp.ne.s32.totalorder %s70, %s84
      %p86 = scmp.eq.s32.totalorder %s18, 0
      %p87 = por %p85, %p86
      %s88 = ssub.s32 %s12, %s19
      %p89 = scmp.eq.s32.totalorder %s88, 0
      %s91 = sadd.s32 %s90, 1
      %s92 = scalar_select %p89, %s90, %s91
      %p95 = pneg %p89
      %p96 = scmp.eq.s32.totalorder %s12, 1
      %p97 = por %p95, %p96
      %p98 = scmp.ne.s32.totalorder %s90, %s93
      %p99 = scmp.eq.s32.totalorder %s12, 0
      %p100 = por %p98, %p99
      %p101 = scmp.ne.s32.totalorder %s90, %s93
      %p102 = scmp.eq.s32.totalorder %s17, 1
      %p103 = por %p101, %p102
      %p104 = scmp.ne.s32.totalorder %s93, %s94
      %p105 = scmp.eq.s32.totalorder %s17, 0
      %p106 = por %p104, %p105
      %p107 = scmp.ne.s32.totalorder %s93, %s94
      %p108 = scmp.eq.s32.totalorder %s18, 1
      %p109 = por %p107, %p108
      %p111 = scmp.ne.s32.totalorder %s94, %s110
      %p112 = scmp.eq.s32.totalorder %s18, 0
      %p113 = por %p111, %p112
      %p114 = scmp.le.s32.totalorder 1, %s12
      %p115 = scmp.lt.s32.totalorder %s12, 3
      %p116 = pnand %p114, %p115
      %p117 = pneg %p116
      // Predicated region
      $region9: #{tpu_custom_call.1} parent=5 // pred_check
        _
      $region10: #{tpu_custom_call.1} parent=5 // pred_check_branch
        %119 = sbr.rel (%p116) target = $region12
      $region11: #{tpu_custom_call.1} parent=5 // pred_region
        %s120 = ssub.s32 %s12, 1
        // Predicated region
        $region13: #{tpu_custom_call.1} parent=11 // pred_check
          %p121 = pneg %p59
        $region14: #{tpu_custom_call.1} parent=11 // pred_check_branch
          %123 = sbr.rel (%p121) target = $region16
        $region15: #{tpu_custom_call.1} parent=11 // pred_region
          _
        $region16: #{tpu_custom_call.1} parent=11 // pred_fallthru
          _
        // Predicated region
        $region17: #{tpu_custom_call.1} parent=11 // pred_check
          %p124 = pneg %p80
        $region18: #{tpu_custom_call.1} parent=11 // pred_check_branch
          %126 = sbr.rel (%p124) target = $region20
        $region19: #{tpu_custom_call.1} parent=11 // pred_region
          _
        $region20: #{tpu_custom_call.1} parent=11 // pred_fallthru
          _
      $region12: #{tpu_custom_call.1} parent=5 // pred_fallthru
        _
      %p127 = scmp.lt.s32.totalorder %s12, 2
      // Predicated region
      $region21: #{tpu_custom_call.1} parent=5 // pred_check
        %p128 = pneg %p127
      $region22: #{tpu_custom_call.1} parent=5 // pred_check_branch
        %130 = sbr.rel (%p128) target = $region24
      $region23: #{tpu_custom_call.1} parent=5 // pred_region
        // Predicated region
        $region25: #{tpu_custom_call.1} parent=23 // pred_check
          %p131 = pneg %p32
        $region26: #{tpu_custom_call.1} parent=23 // pred_check_branch
          %133 = sbr.rel (%p131) target = $region28
        $region27: #{tpu_custom_call.1} parent=23 // pred_region
          %p134 = scmp.lt.s32.totalorder %s12, 1
          %s135 = scalar_select %p134, %s12, 1
          %s136 = smul.addr %s135, 2
          %s137 = smul.addr %s136, 4
          %s138 = scalar_lea.vmem %s0, %s137
        $region28: #{tpu_custom_call.1} parent=23 // pred_fallthru
          _
      $region24: #{tpu_custom_call.1} parent=5 // pred_fallthru
        _
      %p139 = scmp.le.s32.totalorder 1, %s12
      %p140 = scmp.lt.s32.totalorder %s12, 3
      %p141 = pnand %p139, %p140
      %p142 = pneg %p141
      // Predicated region
      $region29: #{tpu_custom_call.1} parent=5 // pred_check
        _
      $region30: #{tpu_custom_call.1} parent=5 // pred_check_branch
        %144 = sbr.rel (%p141) target = $region32
      $region31: #{tpu_custom_call.1} parent=5 // pred_region
        %s145 = ssub.s32 %s12, 1
        %p146 = scmp.lt.s32.totalorder %s17, 1
        %s147 = scalar_select %p146, %s17, 1
        %s148 = smul.addr %s147, 2
        %s149 = smul.addr %s148, 4
        %s150 = scalar_lea.vmem %s0, %s149
        %p151 = pneg %p38
        %p152 = pneg %p35
        %p153 = pneg %p59
        %p154 = pneg %p56
        %p155 = pneg %p80
        %p156 = pneg %p77
        %p157 = pneg %p106
        %p158 = pneg %p103
        %s159 = sand.u32 %s93, 1
        %s160 = scalar_lea.sflag [#allocation3], %s159
        %s161 = sand.u32 %s93, 1
        %s162 = smul.addr %s161, 8
        %s163 = scalar_lea.vmem [#allocation2], %s162
        %p164 = scmp.lt.s32.totalorder %s17, 1
        %s165 = scalar_select %p164, %s17, 1
        %s166 = smul.addr %s165, 2
        %s167 = smul.addr %s166, 4
        %s168 = scalar_lea.vmem %s0, %s167
        %v169 = vld [vmem:[%s168] sm:$0xf]
        %v170 = vld [vmem:[%s168 + $0x4] sm:$0xf]
        %vm171 = vcmask 1043456
        %v172 = vsel %vm171, %v169, 0.0
        %173 = vadd.xlane.f32.xlu0 %v172
        %v174 = vpop.xlane.xlu0 %173
        %v175 = vsel %vm171, %v170, 0.0
        %176 = vadd.xlane.f32.xlu0 %v175
        %v177 = vpop.xlane.xlu0 %176
        %v178 = vsel %vm171, %v174, 0.0
        %v179 = vrot.slane %v178, 4
        %v180 = vadd.f32 %v178, %v179
        %v181 = vrot.slane %v180, 2
        %v182 = vadd.f32 %v180, %v181
        %v183 = vrot.slane %v182, 1
        %v184 = vadd.f32 %v182, %v183
        %v185 = vsel %vm171, %v177, 0.0
        %v186 = vrot.slane %v185, 4
        %v187 = vadd.f32 %v185, %v186
        %v188 = vrot.slane %v187, 2
        %v189 = vadd.f32 %v187, %v188
        %v190 = vrot.slane %v189, 1
        %v191 = vadd.f32 %v189, %v190
        %v192 = vmul.f32 %v184, 0.001953125
        %v193 = vmul.f32 %v191, 0.001953125
        %v194 = vsub.f32 %v169, %v192
        %v195 = vsub.f32 %v170, %v193
        %v196 = vmul.f32 %v194, %v194
        %v197 = vmul.f32 %v195, %v195
        %v198 = vsel %vm171, %v196, 0.0
        %199 = vadd.xlane.f32.xlu0 %v198
        %v200 = vpop.xlane.xlu0 %199
        %v201 = vsel %vm171, %v197, 0.0
        %202 = vadd.xlane.f32.xlu0 %v201
        %v203 = vpop.xlane.xlu0 %202
        %v204 = vsel %vm171, %v200, 0.0
        %v205 = vrot.slane %v204, 4
        %v206 = vadd.f32 %v204, %v205
        %v207 = vrot.slane %v206, 2
        %v208 = vadd.f32 %v206, %v207
        %v209 = vrot.slane %v208, 1
        %v210 = vadd.f32 %v208, %v209
        %v211 = vsel %vm171, %v203, 0.0
        %v212 = vrot.slane %v211, 4
        %v213 = vadd.f32 %v211, %v212
        %v214 = vrot.slane %v213, 2
        %v215 = vadd.f32 %v213, %v214
        %v216 = vrot.slane %v215, 1
        %v217 = vadd.f32 %v215, %v216
        %v218 = vmul.f32 %v192, %v192
        %v219 = vmul.f32 %v193, %v193
        %v220 = vmul.f32 %v218, 0.0
        %v221 = vmul.f32 %v219, 0.0
        %v222 = vsub.f32 %v210, %v220
        %v223 = vsub.f32 %v217, %v221
        %v224 = vmul.f32 %v222, 0.001953125
        %v225 = vmul.f32 %v223, 0.001953125
        %v226 = vmax.f32 %v224, 0.0
        %v227 = vmax.f32 %v225, 0.0
        %v228 = vadd.f32 %v226, 1e-05
        %v229 = vadd.f32 %v227, 1e-05
        %v230 = vrsqrt.pop %v228
        %v231 = vmul.f32 %v230, %v228
        %v232 = vmul.f32 %v231, %v230
        %v233 = vmul.f32 0.5, %v232
        %v234 = vsub.f32 1.5, %v233
        %v235 = vmul.f32 %v230, %v234
        %vm236 = vweird.f32 %v228
        %vm237 = vweird.f32 %v230
        %vm238 = vmor %vm236, %vm237
        %v239 = vsel %vm238, %v230, %v235
        %v240 = vrsqrt.pop %v229
        %v241 = vmul.f32 %v240, %v229
        %v242 = vmul.f32 %v241, %v240
        %v243 = vmul.f32 0.5, %v242
        %v244 = vsub.f32 1.5, %v243
        %v245 = vmul.f32 %v240, %v244
        %vm246 = vweird.f32 %v229
        %vm247 = vweird.f32 %v240
        %vm248 = vmor %vm246, %vm247
        %v249 = vsel %vm248, %v240, %v245
        %v250 = vld [vmem:[%s1] sm:$0xf]
        %v251 = vld [vmem:[%s1 + $0x4] sm:$0xf]
        %v252 = vmul.f32 %v250, %v239
        %v253 = vmul.f32 %v251, %v249
        %v254 = vld [vmem:[%s2] sm:$0xf]
        %v255 = vld [vmem:[%s2 + $0x4] sm:$0xf]
        %257 = vset.pattern.permute.xlu0 0
        %258 = vperm.xlu0 %257, %v252
        %v259 = vpop.permute.xlu0 %258
        %262 = vset.pattern.permute.xlu0 0
        %263 = vperm.xlu0 %262, %v253
        %v264 = vpop.permute.xlu0 %263
        %v266 = vmul.f32 %v194, %v259
        %v267 = vmul.f32 %v195, %v264
        %269 = vset.pattern.permute.xlu0 0
        %270 = vperm.xlu0 %269, %v254
        %v271 = vpop.permute.xlu0 %270
        %274 = vset.pattern.permute.xlu0 0
        %275 = vperm.xlu0 %274, %v255
        %v276 = vpop.permute.xlu0 %275
        %v278 = vadd.f32 %v266, %v271
        %v279 = vadd.f32 %v267, %v276
        %280 = vst [vmem:[%s163] sm:$0xf] %v278
        %281 = vst [vmem:[%s163 + $0x4] sm:$0xf] %v279
        %s282 = sand.u32 %s93, 1
        %s283 = scalar_lea.sflag [#allocation3], %s282
        %s284 = sand.u32 %s93, 1
        %s285 = smul.addr %s284, 8
        %s286 = scalar_lea.vmem [#allocation2], %s285
        // Predicated region
        $region33: #{tpu_custom_call.1} parent=31 // pred_check
          %p287 = pneg %p103
        $region34: #{tpu_custom_call.1} parent=31 // pred_check_branch
          %289 = sbr.rel (%p287) target = $region36
        $region35: #{tpu_custom_call.1} parent=31 // pred_region
          %291 = vsyncadd %s283, 0
          %s292 = smul.addr %s17, 2
          %s293 = smul.addr %s292, 4
          %s294 = scalar_lea.hbm %s3, %s293
          %s295 = sshll.u32 %s286, 4
          %s296 = int_to_ptr.vmem [resolvable:$true] %s295
          %s297 = sshll.u32 %s294, 4
          %s298 = int_to_ptr.hbm [resolvable:$true] %s297
          %303 = dma.vmem_to_hbm [thread:$0]  %s296, 128, %s298, %s283, 64, 64, 4
        $region36: #{tpu_custom_call.1} parent=31 // pred_fallthru
          _
      $region32: #{tpu_custom_call.1} parent=5 // pred_fallthru
        _
      %p304 = scmp.le.s32.totalorder 2, %s12
      // Predicated region
      $region37: #{tpu_custom_call.1} parent=5 // pred_check
        %p305 = pneg %p304
      $region38: #{tpu_custom_call.1} parent=5 // pred_check_branch
        %307 = sbr.rel (%p305) target = $region40
      $region39: #{tpu_custom_call.1} parent=5 // pred_region
        %s308 = ssub.s32 %s12, 2
        // Predicated region
        $region41: #{tpu_custom_call.1} parent=39 // pred_check
          %p309 = pneg %p109
        $region42: #{tpu_custom_call.1} parent=39 // pred_check_branch
          %311 = sbr.rel (%p309) target = $region44
        $region43: #{tpu_custom_call.1} parent=39 // pred_region
          %s312 = sand.u32 %s94, 1
          %s313 = scalar_lea.sflag [#allocation3], %s312
          %s314 = sand.u32 %s94, 1
          %s315 = smul.addr %s314, 8
          %s316 = scalar_lea.vmem [#allocation2], %s315
          %318 = dma.done %s313, 128
        $region44: #{tpu_custom_call.1} parent=39 // pred_fallthru
          _
      $region40: #{tpu_custom_call.1} parent=5 // pred_fallthru
        _
    $region6: #{tpu_custom_call.1} parent=1 // loop_footer
      %s16 = sadd.s32 1, %s12
    $region7: #{tpu_custom_call.1} parent=1 // loop_footer_branch
      %11 = sbr.rel target = $region3
    $region8: #{tpu_custom_call.1} parent=1 // loop_exit
      _
    %319 = vsyncpa [#allocation3], 1
    %s320 = scalar_lea.sflag [#allocation3], 1
    %321 = vsyncpa %s320, 1

</llo_original>
